<compile_context>
chip_gen: v7x
topology: tpu7x:2x2x1
jax: 0.10.0
libtpu: 0.0.40
codegen_flags: <defaults>
</compile_context>

<pallas_src>
import functools

import jax
import jax.numpy as jnp
from jax.experimental import pallas as pl
from jax.experimental.pallas import tpu as pltpu

LANE = 128


def _round_up(x, m):
    return ((x + m - 1) // m) * m


def _vmem_limit_bytes():
    """Generation-aware VMEM limit with headroom for compiler scratch."""
    cap = None
    try:
        cap = pltpu.get_tpu_info().vmem_capacity_bytes
    except Exception:
        cap = None
    if not cap:
        try:
            kind = jax.devices()[0].device_kind.lower()
        except Exception:
            kind = ""
        cap = 64 * 2**20 if "v7" in kind else 128 * 2**20
    return int(cap * 7 // 8)  # ~56 MiB on v7x, ~112 MiB on v5e/v6e


def _bf16_tanh_ok():
    """bf16 EUP tanh is a win on v6e/v7x; keep f32 on v5e and older."""
    try:
        kind = jax.devices()[0].device_kind.lower()
    except Exception:
        return True
    return not any(t in kind for t in ("v2", "v3", "v4", "v5"))


def _pick_tk(h_pad):
    """Largest K-tile <= 1024 that divides H_pad (full extent if small)."""
    if h_pad <= 1024:
        return h_pad
    for cand in (1024, 896, 768, 640, 512, 384, 256, 128):
        if h_pad % cand == 0:
            return cand
    return 128  # unreachable: h_pad is a multiple of 128


def preprocess_lm_head_params(w_dense, b_dense, w_out, b_out,
                              *, param_dtype=jnp.bfloat16):
    """One-time padding + cast of the head parameters.

    Hoisted out of the per-call path: at H=4096 this avoids re-reading 64 MiB
    of f32 W1 and re-writing a 32 MiB bf16 copy in XLA on every forward call.
    """
    H = w_dense.shape[0]
    L = w_out.shape[1]
    assert w_dense.shape == (H, H) and b_dense.shape == (H,)
    assert w_out.shape == (H, L) and b_out.shape == (L,)

    H_pad = _round_up(H, LANE if H <= 1024 else 256)
    L_pad = _round_up(L, LANE)  # lane-dense output / full MXU N dim

    w1 = jnp.zeros((H_pad, H_pad), param_dtype).at[:H, :H].set(
        w_dense.astype(param_dtype))
    b1 = jnp.zeros((1, H_pad), jnp.float32).at[0, :H].set(
        b_dense.astype(jnp.float32))
    w2 = jnp.zeros((H_pad, L_pad), param_dtype).at[:H, :L].set(
        w_out.astype(param_dtype))
    b2 = jnp.zeros((1, L_pad), jnp.float32).at[0, :L].set(
        b_out.astype(jnp.float32))
    # TODO(synk): optional W1 quantization (int8 on v5e/v6e, fp8-e4m3 on v7x)
    # would halve the HBM-bound W1 stream; kept bf16 here for exact padding math.
    return {"w1": w1, "b1": b1, "w2": w2, "b2": b2,
            "H": H, "L": L, "H_pad": H_pad, "L_pad": L_pad}


def _head_kernel(x_ref, w1_ref, b1_ref, w2_ref, b2_ref, o_ref, acc_ref,
                 *, n_chunks, tk, bf16_tanh):
    k = pl.program_id(1)

    @pl.when(k == 0)
    def _():
        acc_ref[...] = jnp.zeros_like(acc_ref)

    # Partial first matmul: (TM, TK) @ (TK, H_pad), accumulated in f32.
    acc_ref[...] += jnp.dot(x_ref[...], w1_ref[...],
                            preferred_element_type=jnp.float32)

    @pl.when(k == pl.num_programs(1) - 1)
    def _():
        # Epilogue chunked over H so the EUP tanh of chunk j+1 can co-issue
        # with the MXU second matmul of chunk j (separate VLIW slots).
        # Dropout = identity (eval mode).
        out = jnp.zeros(o_ref.shape, jnp.float32) + b2_ref[...]
        for c in range(n_chunks):          # static trip count -> fully unrolled
            sl = pl.ds(c * tk, tk)
            h = acc_ref[:, sl] + b1_ref[:, sl]
            if bf16_tanh:
                h = jnp.tanh(h.astype(jnp.bfloat16))   # bf16 EUP on v6e/v7x
            else:
                h = jnp.tanh(h)                         # f32 path (v5e)
            out += jnp.dot(h.astype(w2_ref.dtype), w2_ref[sl, :],
                           preferred_element_type=jnp.float32)
        o_ref[...] = out.astype(o_ref.dtype)


def lm_classification_head(x, params, *, act_dtype=jnp.bfloat16):
    """x: [B, H]; params: output of preprocess_lm_head_params."""
    B, H = x.shape
    assert H == params["H"], "hidden size mismatch with preprocessed params"
    H_pad, L_pad, L = params["H_pad"], params["L_pad"], params["L"]
    out_dtype = x.dtype
    vmem_limit = _vmem_limit_bytes()

    # ---- tile planning ------------------------------------------------------
    if B >= 256:
        TM = 256
    elif B >= 128:
        TM = 128
    else:
        TM = _round_up(B, 8)              # sublane-aligned rows
    B_pad = _round_up(B, TM)
    TK = _pick_tk(H_pad)
    n_buf = 3                             # 3-deep pipeline hides the epilogue

    act_sz = jnp.dtype(act_dtype).itemsize
    par_sz = jnp.dtype(params["w1"].dtype).itemsize
    out_sz = jnp.dtype(out_dtype).itemsize

    def vmem_bytes(tm, tk, nbuf):
        return (nbuf * tm * tk * act_sz            # x stream
                + nbuf * tk * H_pad * par_sz       # W1 stream
                + 2 * H_pad * 4                    # b1
                + 2 * H_pad * L_pad * par_sz       # W2 (resident)
                + 2 * L_pad * 4                    # b2
                + 2 * tm * L_pad * out_sz          # output
                + tm * H_pad * 4)                  # f32 accumulator

    budget = vmem_limit - (4 << 20)
    if vmem_bytes(TM, TK, n_buf) > budget:
        n_buf = 2
    while (vmem_bytes(TM, TK, n_buf) > budget and TK > 256
           and TK % 256 == 0 and H_pad % (TK // 2) == 0):
        TK //= 2
    while vmem_bytes(TM, TK, n_buf) > budget and TM > 128:
        TM //= 2
        B_pad = _round_up(B, TM)

    grid = (B_pad // TM, H_pad // TK)
    n_steps = grid[0] * grid[1]
    stream_mode = pl.Buffered(n_buf) if n_steps >= n_buf else None

    def _stream_spec(shape, index_map):
        if stream_mode is None:
            return pl.BlockSpec(shape, index_map)
        return pl.BlockSpec(shape, index_map, pipeline_mode=stream_mode)

    # ---- pad + cast activations only (weights are preprocessed) ------------
    xp = jnp.zeros((B_pad, H_pad), act_dtype).at[:B, :H].set(x.astype(act_dtype))

    # W1 is re-streamed once per batch tile -> count it grid[0] times.
    cost = pl.CostEstimate(
        flops=2 * B_pad * H_pad * H_pad + 2 * B_pad * H_pad * L_pad,
        transcendentals=B_pad * H_pad,
        bytes_accessed=(B_pad * H_pad * act_sz
                        + grid[0] * H_pad * H_pad * par_sz
                        + H_pad * L_pad * par_sz
                        + (H_pad + L_pad) * 4
                        + B_pad * L_pad * out_sz),
    )

    kernel = functools.partial(_head_kernel, n_chunks=H_pad // TK, tk=TK,
                               bf16_tanh=_bf16_tanh_ok())

    # TODO(synk): for v7x small-batch (single batch tile) the second TensorCore
    # idles; a column-split of W1 across cores would recover it once compute-bound.
    out_padded = pl.pallas_call(
        kernel,
        out_shape=jax.ShapeDtypeStruct((B_pad, L_pad), out_dtype),
        grid=grid,
        in_specs=[
            _stream_spec((TM, TK), lambda i, k: (i, k)),        # x: streams (i, k)
            _stream_spec((TK, H_pad), lambda i, k: (k, 0)),     # W1: streams over k
            pl.BlockSpec((1, H_pad), lambda i, k: (0, 0)),      # b1: resident
            pl.BlockSpec((H_pad, L_pad), lambda i, k: (0, 0)),  # W2: resident
            pl.BlockSpec((1, L_pad), lambda i, k: (0, 0)),      # b2: resident
        ],
        out_specs=pl.BlockSpec((TM, L_pad), lambda i, k: (i, 0)),
        scratch_shapes=[pltpu.VMEM((TM, H_pad), jnp.float32)],  # f32 accumulator
        compiler_params=pltpu.CompilerParams(
            dimension_semantics=("parallel", "arbitrary"),
            vmem_limit_bytes=vmem_limit,
        ),
        cost_estimate=cost,
    )(xp, params["w1"], params["b1"], params["w2"], params["b2"])

    return out_padded[:B, :L]


if __name__ == "__main__":
    B, H, L = 8, 32, 2
    key = jax.random.PRNGKey(0)
    kx, kw1, kb1, kw2, kb2 = jax.random.split(key, 5)

    x = jax.random.normal(kx, (B, H), dtype=jnp.float32)
    # Parameters stored already transposed to [in, out] (PyTorch Linear is [out, in]).
    w_dense = jax.random.normal(kw1, (H, H), dtype=jnp.float32) * 0.05
    b_dense = jax.random.normal(kb1, (H,), dtype=jnp.float32) * 0.05
    w_out = jax.random.normal(kw2, (H, L), dtype=jnp.float32) * 0.05
    b_out = jax.random.normal(kb2, (L,), dtype=jnp.float32) * 0.05

    # One-time parameter preprocessing (padding + bf16 cast), hoisted out of
    # the per-call path.
    params = preprocess_lm_head_params(w_dense, b_dense, w_out, b_out)

    out = lm_classification_head(x, params)
    jax.block_until_ready(out)

    # Pure-JAX f32 reference (dropout = identity in eval mode); bf16 weights /
    # activations in the kernel -> relaxed tolerance.
    ref = jnp.tanh(x @ w_dense + b_dense) @ w_out + b_out
    assert out.shape == (B, L)
    assert jnp.allclose(out, ref, atol=2e-2, rtol=2e-2), float(
        jnp.max(jnp.abs(out - ref)))
    print("KERNEL_OK")
</pallas_src>

<mosaic_0001>
module attributes {stable_mosaic.version = 11 : i64} {
  func.func @_head_kernel(%arg0: i32, %arg1: i32, %arg2: memref<8x128xbf16, #tpu.memory_space<vmem>>, %arg3: memref<128x128xbf16, #tpu.memory_space<vmem>>, %arg4: memref<1x128xf32, #tpu.memory_space<vmem>>, %arg5: memref<128x128xbf16, #tpu.memory_space<vmem>>, %arg6: memref<1x128xf32, #tpu.memory_space<vmem>>, %arg7: memref<8x128xf32, #tpu.memory_space<vmem>>, %arg8: memref<8x128xf32, #tpu.memory_space<vmem>>) attributes {dimension_semantics = [#tpu.dimension_semantics<parallel>, #tpu.dimension_semantics<arbitrary>], iteration_bounds = array<i64: 1, 1>, scalar_prefetch = 0 : i64, scratch_operands = 1 : i64, tpu.core_type = #tpu.core_type<tc>, window_params = [{transform_indices = @transform_0, window_bounds = array<i64: 8, 128>}, {transform_indices = @transform_1, window_bounds = array<i64: 128, 128>}, {pipeline_mode = #tpu.pipeline_mode<synchronous>, transform_indices = @transform_2, window_bounds = array<i64: 1, 128>}, {pipeline_mode = #tpu.pipeline_mode<synchronous>, transform_indices = @transform_3, window_bounds = array<i64: 128, 128>}, {pipeline_mode = #tpu.pipeline_mode<synchronous>, transform_indices = @transform_4, window_bounds = array<i64: 1, 128>}, {transform_indices = @transform_5, window_bounds = array<i64: 8, 128>}]} {
    %c0_i32 = arith.constant 0 : i32
    %0 = arith.cmpi eq, %arg1, %c0_i32 : i32
    %1 = arith.extui %0 : i1 to i32
    %c0_i32_0 = arith.constant 0 : i32
    %2 = arith.cmpi ne, %1, %c0_i32_0 : i32
    scf.if %2 {
      %cst_10 = arith.constant 0.000000e+00 : f32
      %12 = vector.broadcast %cst_10 : f32 to vector<8x128xf32>
      %c0_11 = arith.constant 0 : index
      %c0_12 = arith.constant 0 : index
      %13 = vector.load %arg8[%c0_11, %c0_12] : memref<8x128xf32, #tpu.memory_space<vmem>>, vector<8x128xf32>
      tpu.vector_store %arg8[%c0_11, %c0_12], %12 {strides = array<i32>} : memref<8x128xf32, #tpu.memory_space<vmem>>, vector<8x128xf32>,
    } else {
    }
    %c0 = arith.constant 0 : index
    %c0_1 = arith.constant 0 : index
    %3 = vector.load %arg8[%c0, %c0_1] : memref<8x128xf32, #tpu.memory_space<vmem>>, vector<8x128xf32>
    %c0_2 = arith.constant 0 : index
    %c0_3 = arith.constant 0 : index
    %4 = vector.load %arg2[%c0_2, %c0_3] : memref<8x128xbf16, #tpu.memory_space<vmem>>, vector<8x128xbf16>
    %c0_4 = arith.constant 0 : index
    %c0_5 = arith.constant 0 : index
    %5 = vector.load %arg3[%c0_4, %c0_5] : memref<128x128xbf16, #tpu.memory_space<vmem>>, vector<128x128xbf16>
    %cst = arith.constant dense<0.000000e+00> : vector<8x128xf32>
    %6 = tpu.matmul %4, %5, %cst {dimension_numbers = #tpu.dot_dimension_numbers<[1], [0], [0], [1], [0, 0, 1, 1], [], []>} : vector<8x128xbf16>, vector<128x128xbf16>, vector<8x128xf32> -> vector<8x128xf32>
    %7 = arith.addf %3, %6 : vector<8x128xf32>
    %c0_6 = arith.constant 0 : index
    %c0_7 = arith.constant 0 : index
    %8 = vector.load %arg8[%c0_6, %c0_7] : memref<8x128xf32, #tpu.memory_space<vmem>>, vector<8x128xf32>
    tpu.vector_store %arg8[%c0_6, %c0_7], %7 {strides = array<i32>} : memref<8x128xf32, #tpu.memory_space<vmem>>, vector<8x128xf32>,
    %c0_i32_8 = arith.constant 0 : i32
    %9 = arith.cmpi eq, %arg1, %c0_i32_8 : i32
    %10 = arith.extui %9 : i1 to i32
    %c0_i32_9 = arith.constant 0 : i32
    %11 = arith.cmpi ne, %10, %c0_i32_9 : i32
    scf.if %11 {
      %cst_10 = arith.constant 0.000000e+00 : f32
      %12 = vector.broadcast %cst_10 : f32 to vector<8x128xf32>
      %c0_11 = arith.constant 0 : index
      %c0_12 = arith.constant 0 : index
      %13 = vector.load %arg6[%c0_11, %c0_12] : memref<1x128xf32, #tpu.memory_space<vmem>>, vector<1x128xf32>
      %14 = vector.broadcast %13 : vector<1x128xf32> to vector<8x128xf32>
      %15 = arith.addf %12, %14 : vector<8x128xf32>
      %c0_13 = arith.constant 0 : index
      %c0_14 = arith.constant 0 : index
      %16 = vector.load %arg8[%c0_13, %c0_14] : memref<8x128xf32, #tpu.memory_space<vmem>>, vector<8x128xf32>
      %c0_15 = arith.constant 0 : index
      %c0_16 = arith.constant 0 : index
      %17 = vector.load %arg4[%c0_15, %c0_16] : memref<1x128xf32, #tpu.memory_space<vmem>>, vector<1x128xf32>
      %18 = vector.broadcast %17 : vector<1x128xf32> to vector<8x128xf32>
      %19 = arith.addf %16, %18 : vector<8x128xf32>
      %20 = arith.truncf %19 : vector<8x128xf32> to vector<8x128xbf16>
      %21 = math.tanh %20 : vector<8x128xbf16>
      %c0_17 = arith.constant 0 : index
      %c0_18 = arith.constant 0 : index
      %22 = vector.load %arg5[%c0_17, %c0_18] : memref<128x128xbf16, #tpu.memory_space<vmem>>, vector<128x128xbf16>
      %cst_19 = arith.constant dense<0.000000e+00> : vector<8x128xf32>
      %23 = tpu.matmul %21, %22, %cst_19 {dimension_numbers = #tpu.dot_dimension_numbers<[1], [0], [0], [1], [0, 0, 1, 1], [], []>} : vector<8x128xbf16>, vector<128x128xbf16>, vector<8x128xf32> -> vector<8x128xf32>
      %24 = arith.addf %15, %23 : vector<8x128xf32>
      %c0_20 = arith.constant 0 : index
      %c0_21 = arith.constant 0 : index
      %25 = vector.load %arg7[%c0_20, %c0_21] : memref<8x128xf32, #tpu.memory_space<vmem>>, vector<8x128xf32>
      tpu.vector_store %arg7[%c0_20, %c0_21], %24 {strides = array<i32>} : memref<8x128xf32, #tpu.memory_space<vmem>>, vector<8x128xf32>,
    } else {
    }
    return
  }
  func.func @transform_0(%arg0: i32, %arg1: i32) -> (i32, i32) {
    %c0_i32 = arith.constant 0 : i32
    return %arg0, %arg1 : i32, i32
  }
  func.func @transform_1(%arg0: i32, %arg1: i32) -> (i32, i32) {
    %c0_i32 = arith.constant 0 : i32
    %c0_i32_0 = arith.constant 0 : i32
    return %arg1, %c0_i32 : i32, i32
  }
  func.func @transform_2(%arg0: i32, %arg1: i32) -> (i32, i32) {
    %c0_i32 = arith.constant 0 : i32
    %c0_i32_0 = arith.constant 0 : i32
    %c0_i32_1 = arith.constant 0 : i32
    return %c0_i32, %c0_i32_0 : i32, i32
  }
  func.func @transform_3(%arg0: i32, %arg1: i32) -> (i32, i32) {
    %c0_i32 = arith.constant 0 : i32
    %c0_i32_0 = arith.constant 0 : i32
    %c0_i32_1 = arith.constant 0 : i32
    return %c0_i32, %c0_i32_0 : i32, i32
  }
  func.func @transform_4(%arg0: i32, %arg1: i32) -> (i32, i32) {
    %c0_i32 = arith.constant 0 : i32
    %c0_i32_0 = arith.constant 0 : i32
    %c0_i32_1 = arith.constant 0 : i32
    return %c0_i32, %c0_i32_0 : i32, i32
  }
  func.func @transform_5(%arg0: i32, %arg1: i32) -> (i32, i32) {
    %c0_i32 = arith.constant 0 : i32
    %c0_i32_0 = arith.constant 0 : i32
    return %arg0, %c0_i32 : i32, i32
  }
}

</mosaic_0001>

<llo_original>
// kernel: tpu_custom_call.1
$region0: #{tpu_custom_call.1}
  #allocation0 [shape = 'u32[]', space=smem, size = 0x4, offset = 0x4, fixed_abs, tag = 'smem constant byte address 0x4 - core index']
  #allocation1 [shape = 'u32[144,128]{1,0:T(1,128)}', space=vmem, size = 0x12000, scoped, tag = 'internal scratch']
  #allocation2 [shape = 'f32[8,128]{1,0:T(8,128)}', space=vmem, size = 0x1000, scoped, tag = 'scratch operand']
  %s0 = inlined_call_operand.hbm [shape: bf16[8,128], index: 0, kind: input, shape index: {}]
  %s1 = inlined_call_operand.hbm [shape: bf16[128,128], index: 1, kind: input, shape index: {}]
  %s2 = inlined_call_operand.hbm [shape: f32[1,128], index: 2, kind: input, shape index: {}]
  %s3 = inlined_call_operand.hbm [shape: bf16[128,128], index: 3, kind: input, shape index: {}]
  %s4 = inlined_call_operand.hbm [shape: f32[1,128], index: 4, kind: input, shape index: {}]
  %s5 = inlined_call_operand.hbm [shape: f32[8,128], index: 5, kind: output, shape index: {}]
  %s6 = sld [smem:[#allocation0]]
  $region58: #{tpu_custom_call.1} parent=0
    _
  %s8 = ssub.s32 1, %s6
  %s9 = scalar_select 0, %s8, %s6
  $region1: #{tpu_custom_call.1} parent=0
    #allocation3 [shape = 'u8[2048]{0}', space=vmem, size = 0x800, scoped, tag = 'input window, operand 0, single buffered']
    #allocation4 [shape = 's32[1]{0}', space=sflag, size = 0x4, scoped, tag = 'scoped memory for tpu_custom_call.1']
    #allocation5 [shape = 's32[1]{0}', space=sflag, size = 0x4, scoped, tag = 'scoped memory for tpu_custom_call.1']
    #allocation6 [shape = 'u8[32768]{0}', space=vmem, size = 0x8000, scoped, tag = 'input window, operand 1, single buffered']
    #allocation7 [shape = 's32[1]{0}', space=sflag, size = 0x4, scoped, tag = 'scoped memory for tpu_custom_call.1']
    #allocation8 [shape = 'u8[512]{0}', space=vmem, size = 0x400, scoped, tag = 'input window, operand 2, single buffered']
    #allocation9 [shape = 'u8[32768]{0}', space=vmem, size = 0x8000, scoped, tag = 'input window, operand 3, single buffered']
    #allocation10 [shape = 's32[1]{0}', space=sflag, size = 0x4, scoped, tag = 'scoped memory for tpu_custom_call.1']
    #allocation11 [shape = 'u8[512]{0}', space=vmem, size = 0x400, scoped, tag = 'input window, operand 4, single buffered']
    #allocation12 [shape = 'u8[4096]{0}', space=vmem, size = 0x1000, scoped, tag = 'output window, operand 0, single buffered']
    %10 = vsyncpa [#allocation4], 0
    %11 = vsyncpa [#allocation7], 0
    %12 = vsyncpa [#allocation10], 0
    %13 = vsyncpa [#allocation5], 0
    // Predicated region
    $region2: #{tpu_custom_call.1} parent=1 // pred_check
      _
    $region3: #{tpu_custom_call.1} parent=1 // pred_check_branch
      %15 = sbr.rel (0) target = $region5
    $region4: #{tpu_custom_call.1} parent=1 // pred_region
      %s17 = ssub.s32 64, 64
      %18 = vsyncadd [#allocation4], %s17
      %s20 = sshll.u32 [#allocation3], 4
      %s21 = int_to_ptr.vmem [resolvable:$true] %s20
      %23 = dma.hbm_to_vmem [thread:$0]  %s0, 64, %s21, [#allocation4]
    $region5: #{tpu_custom_call.1} parent=1 // pred_fallthru
      _
    // Predicated region
    $region6: #{tpu_custom_call.1} parent=1 // pred_check
      _
    $region7: #{tpu_custom_call.1} parent=1 // pred_check_branch
      %25 = sbr.rel (0) target = $region9
    $region8: #{tpu_custom_call.1} parent=1 // pred_region
      %s27 = ssub.s32 1024, 1024
      %28 = vsyncadd [#allocation7], %s27
      %s29 = sshll.u32 [#allocation6], 4
      %s30 = int_to_ptr.vmem [resolvable:$true] %s29
      %35 = dma.hbm_to_vmem [thread:$0]  %s1, 1024, %s30, [#allocation7], 64, 64, 4
    $region9: #{tpu_custom_call.1} parent=1 // pred_fallthru
      _
    // Predicated region
    $region10: #{tpu_custom_call.1} parent=1 // pred_check
      _
    $region11: #{tpu_custom_call.1} parent=1 // pred_check_branch
      %37 = sbr.rel (0) target = $region13
    $region12: #{tpu_custom_call.1} parent=1 // pred_region
      %s39 = ssub.s32 16, 16
      %40 = vsyncadd [#allocation7], %s39
      %s42 = sshll.u32 [#allocation8], 4
      %s43 = int_to_ptr.vmem [resolvable:$true] %s42
      %45 = dma.hbm_to_vmem [thread:$0]  %s2, 16, %s43, [#allocation7]
    $region13: #{tpu_custom_call.1} parent=1 // pred_fallthru
      _
    // Predicated region
    $region14: #{tpu_custom_call.1} parent=1 // pred_check
      _
    $region15: #{tpu_custom_call.1} parent=1 // pred_check_branch
      %47 = sbr.rel (0) target = $region17
    $region16: #{tpu_custom_call.1} parent=1 // pred_region
      %s49 = ssub.s32 1024, 1024
      %50 = vsyncadd [#allocation10], %s49
      %s51 = sshll.u32 [#allocation9], 4
      %s52 = int_to_ptr.vmem [resolvable:$true] %s51
      %57 = dma.hbm_to_vmem [thread:$0]  %s3, 1024, %s52, [#allocation10], 64, 64, 4
    $region17: #{tpu_custom_call.1} parent=1 // pred_fallthru
      _
    // Predicated region
    $region18: #{tpu_custom_call.1} parent=1 // pred_check
      _
    $region19: #{tpu_custom_call.1} parent=1 // pred_check_branch
      %59 = sbr.rel (0) target = $region21
    $region20: #{tpu_custom_call.1} parent=1 // pred_region
      %s61 = ssub.s32 16, 16
      %62 = vsyncadd [#allocation10], %s61
      %s64 = sshll.u32 [#allocation11], 4
      %s65 = int_to_ptr.vmem [resolvable:$true] %s64
      %67 = dma.hbm_to_vmem [thread:$0]  %s4, 16, %s65, [#allocation10]
    $region21: #{tpu_custom_call.1} parent=1 // pred_fallthru
      _
    // Predicated region
    $region22: #{tpu_custom_call.1} parent=1 // pred_check
      _
    $region23: #{tpu_custom_call.1} parent=1 // pred_check_branch
      %69 = sbr.rel (0) target = $region25
    $region24: #{tpu_custom_call.1} parent=1 // pred_region
      %70 = dma.done [#allocation4], 64
    $region25: #{tpu_custom_call.1} parent=1 // pred_fallthru
      _
    // Predicated region
    $region26: #{tpu_custom_call.1} parent=1 // pred_check
      _
    $region27: #{tpu_custom_call.1} parent=1 // pred_check_branch
      %72 = sbr.rel (0) target = $region29
    $region28: #{tpu_custom_call.1} parent=1 // pred_region
      %73 = dma.done [#allocation7], 1024
    $region29: #{tpu_custom_call.1} parent=1 // pred_fallthru
      _
    // Predicated region
    $region30: #{tpu_custom_call.1} parent=1 // pred_check
      _
    $region31: #{tpu_custom_call.1} parent=1 // pred_check_branch
      %75 = sbr.rel (0) target = $region33
    $region32: #{tpu_custom_call.1} parent=1 // pred_region
      %76 = dma.done [#allocation7], 16
    $region33: #{tpu_custom_call.1} parent=1 // pred_fallthru
      _
    // Predicated region
    $region34: #{tpu_custom_call.1} parent=1 // pred_check
      _
    $region35: #{tpu_custom_call.1} parent=1 // pred_check_branch
      %78 = sbr.rel (0) target = $region37
    $region36: #{tpu_custom_call.1} parent=1 // pred_region
      %79 = dma.done [#allocation10], 1024
    $region37: #{tpu_custom_call.1} parent=1 // pred_fallthru
      _
    // Predicated region
    $region38: #{tpu_custom_call.1} parent=1 // pred_check
      _
    $region39: #{tpu_custom_call.1} parent=1 // pred_check_branch
      %81 = sbr.rel (0) target = $region41
    $region40: #{tpu_custom_call.1} parent=1 // pred_region
      %82 = dma.done [#allocation10], 16
    $region41: #{tpu_custom_call.1} parent=1 // pred_fallthru
      _
    %p84 = scmp.eq.s32.totalorder 0, 0
    // Predicated region
    $region42: #{tpu_custom_call.1} parent=1 // pred_check
      %p85 = pneg %p84
    $region43: #{tpu_custom_call.1} parent=1 // pred_check_branch
      %87 = sbr.rel (%p85) target = $region45
    $region44: #{tpu_custom_call.1} parent=1 // pred_region
      %88 = vst [vmem:[#allocation2] sm:$0xff] 0.0
    $region45: #{tpu_custom_call.1} parent=1 // pred_fallthru
      _
    %v89 = vld [vmem:[#allocation2] sm:$0xff]
    %v90 = vld [vmem:[#allocation3] sm:$0xf]
    %v91 = vld [vmem:[#allocation6] sm:$0xf]
    %v92 = vld [vmem:[#allocation6 + $0x4] sm:$0xf]
    %v93 = vld [vmem:[#allocation6 + $0x8] sm:$0xf]
    %v94 = vld [vmem:[#allocation6 + $0xc] sm:$0xf]
    %v95 = vld [vmem:[#allocation6 + $0x10] sm:$0xf]
    %v96 = vld [vmem:[#allocation6 + $0x14] sm:$0xf]
    %v97 = vld [vmem:[#allocation6 + $0x18] sm:$0xf]
    %v98 = vld [vmem:[#allocation6 + $0x1c] sm:$0xf]
    %v99 = vld [vmem:[#allocation6 + $0x20] sm:$0xf]
    %v100 = vld [vmem:[#allocation6 + $0x24] sm:$0xf]
    %v101 = vld [vmem:[#allocation6 + $0x28] sm:$0xf]
    %v102 = vld [vmem:[#allocation6 + $0x2c] sm:$0xf]
    %v103 = vld [vmem:[#allocation6 + $0x30] sm:$0xf]
    %v104 = vld [vmem:[#allocation6 + $0x34] sm:$0xf]
    %v105 = vld [vmem:[#allocation6 + $0x38] sm:$0xf]
    %v106 = vld [vmem:[#allocation6 + $0x3c] sm:$0xf]
    %v123 = vunpack.c.l.b16 %v91
    %v124 = vunpack.c.l.b16 %v92
    %v125 = vunpack.c.l.b16 %v93
    %v126 = vunpack.c.l.b16 %v94
    %v127 = vunpack.c.l.b16 %v95
    %v128 = vunpack.c.l.b16 %v96
    %v129 = vunpack.c.l.b16 %v97
    %v130 = vunpack.c.l.b16 %v98
    %v131 = vunpack.c.l.b16 %v99
    %v132 = vunpack.c.l.b16 %v100
    %v133 = vunpack.c.l.b16 %v101
    %v134 = vunpack.c.l.b16 %v102
    %v135 = vunpack.c.l.b16 %v103
    %v136 = vunpack.c.l.b16 %v104
    %v137 = vunpack.c.l.b16 %v105
    %v138 = vunpack.c.l.b16 %v106
    %v139 = vpack.c.b16 %v124, %v123
    %v140 = vpack.c.b16 %v126, %v125
    %v141 = vpack.c.b16 %v128, %v127
    %v142 = vpack.c.b16 %v130, %v129
    %v143 = vpack.c.b16 %v132, %v131
    %v144 = vpack.c.b16 %v134, %v133
    %v145 = vpack.c.b16 %v136, %v135
    %v146 = vpack.c.b16 %v138, %v137
    %155 = vmatprep.subr.bf16.mxu0 0
    %156 = vmatpush1.bf16.msra.mxu0 %v139
    %157 = vmatprep.subr.bf16.mxu0 0
    %158 = vmatpush1.bf16.msra.mxu0 %v140
    %159 = vmatprep.subr.bf16.mxu0 0
    %160 = vmatpush1.bf16.msra.mxu0 %v141
    %161 = vmatprep.subr.bf16.mxu0 0
    %162 = vmatpush1.bf16.msra.mxu0 %v142
    %163 = vmatprep.subr.bf16.mxu0 0
    %164 = vmatpush1.bf16.msra.mxu0 %v143
    %165 = vmatprep.subr.bf16.mxu0 0
    %166 = vmatpush1.bf16.msra.mxu0 %v144
    %167 = vmatprep.subr.bf16.mxu0 0
    %168 = vmatpush1.bf16.msra.mxu0 %v145
    %169 = vmatprep.subr.bf16.mxu0 0
    %170 = vmatpush1.bf16.msra.mxu0 %v146
    %171 = vmatprep.subr.bf16.mxu0 0
    %172 = vmatpush1.bf16.msra.mxu0 0
    %173 = vmatprep.subr.bf16.mxu0 0
    %174 = vmatpush1.bf16.msra.mxu0 0
    %175 = vmatprep.subr.bf16.mxu0 0
    %176 = vmatpush1.bf16.msra.mxu0 0
    %177 = vmatprep.subr.bf16.mxu0 0
    %178 = vmatpush1.bf16.msra.mxu0 0
    %179 = vmatprep.subr.bf16.mxu0 0
    %180 = vmatpush1.bf16.msra.mxu0 0
    %181 = vmatprep.subr.bf16.mxu0 0
    %182 = vmatpush1.bf16.msra.mxu0 0
    %183 = vmatprep.subr.bf16.mxu0 0
    %184 = vmatpush1.bf16.msra.mxu0 0
    %185 = vmatprep.subr.bf16.mxu0 0
    %186 = vmatpush1.bf16.msra.mxu0 0
    %187 = vmatprep.mubr.bf16.mxu0 0
    %188 = vmatmul.mubr.bf16.gmra.mrb[0].mxu0 %v90
    %v189 = vpop.f32.mrb[0].mxu0
    %v190 = vadd.f32 0.0, %v189
    %v191 = vpop.f32.mrb[0].mxu0
    %v192 = vpop.f32.mrb[0].mxu0
    %v193 = vpop.f32.mrb[0].mxu0
    %194 = vdwg.mxu0
    %v195 = vadd.f32 %v89, %v190
    %196 = vst [vmem:[#allocation2] sm:$0xff] %v195
    // Predicated region
    $region46: #{tpu_custom_call.1} parent=1 // pred_check
      %p197 = pneg %p84
    $region47: #{tpu_custom_call.1} parent=1 // pred_check_branch
      %199 = sbr.rel (%p197) target = $region49
    $region48: #{tpu_custom_call.1} parent=1 // pred_region
      %v200 = vld [vmem:[#allocation11] sm:$0x1]
      %v202 = vlaneseq
      %v203 = vshrl.u32 %v202, 7
      %v204 = vsub.s32 0, %v203
      %v205 = vrot.slane %v200, %v204
      %v207 = vadd.f32 %v205, 0.0
      %v208 = vld [vmem:[#allocation2] sm:$0xff]
      %v209 = vld [vmem:[#allocation8] sm:$0x1]
      %v211 = vlaneseq
      %v212 = vshrl.u32 %v211, 7
      %v213 = vsub.s32 0, %v212
      %v214 = vrot.slane %v209, %v213
      %v216 = vadd.f32 %v208, %v214
      %v217 = vpack.c.bf16 %v216, %v216
      %v218 = vtanh.bf16.pop %v217
      %v219 = vld [vmem:[#allocation9] sm:$0xf]
      %v220 = vld [vmem:[#allocation9 + $0x4] sm:$0xf]
      %v221 = vld [vmem:[#allocation9 + $0x8] sm:$0xf]
      %v222 = vld [vmem:[#allocation9 + $0xc] sm:$0xf]
      %v223 = vld [vmem:[#allocation9 + $0x10] sm:$0xf]
      %v224 = vld [vmem:[#allocation9 + $0x14] sm:$0xf]
      %v225 = vld [vmem:[#allocation9 + $0x18] sm:$0xf]
      %v226 = vld [vmem:[#allocation9 + $0x1c] sm:$0xf]
      %v227 = vld [vmem:[#allocation9 + $0x20] sm:$0xf]
      %v228 = vld [vmem:[#allocation9 + $0x24] sm:$0xf]
      %v229 = vld [vmem:[#allocation9 + $0x28] sm:$0xf]
      %v230 = vld [vmem:[#allocation9 + $0x2c] sm:$0xf]
      %v231 = vld [vmem:[#allocation9 + $0x30] sm:$0xf]
      %v232 = vld [vmem:[#allocation9 + $0x34] sm:$0xf]
      %v233 = vld [vmem:[#allocation9 + $0x38] sm:$0xf]
      %v234 = vld [vmem:[#allocation9 + $0x3c] sm:$0xf]
      %v251 = vunpack.c.l.b16 %v219
      %v252 = vunpack.c.l.b16 %v220
      %v253 = vunpack.c.l.b16 %v221
      %v254 = vunpack.c.l.b16 %v222
      %v255 = vunpack.c.l.b16 %v223
      %v256 = vunpack.c.l.b16 %v224
      %v257 = vunpack.c.l.b16 %v225
      %v258 = vunpack.c.l.b16 %v226
      %v259 = vunpack.c.l.b16 %v227
      %v260 = vunpack.c.l.b16 %v228
      %v261 = vunpack.c.l.b16 %v229
      %v262 = vunpack.c.l.b16 %v230
      %v263 = vunpack.c.l.b16 %v231
      %v264 = vunpack.c.l.b16 %v232
      %v265 = vunpack.c.l.b16 %v233
      %v266 = vunpack.c.l.b16 %v234
      %v267 = vpack.c.b16 %v252, %v251
      %v268 = vpack.c.b16 %v254, %v253
      %v269 = vpack.c.b16 %v256, %v255
      %v270 = vpack.c.b16 %v258, %v257
      %v271 = vpack.c.b16 %v260, %v259
      %v272 = vpack.c.b16 %v262, %v261
      %v273 = vpack.c.b16 %v264, %v263
      %v274 = vpack.c.b16 %v266, %v265
      %283 = vmatprep.subr.bf16.mxu0 0
      %284 = vmatpush1.bf16.msra.mxu0 %v267
      %285 = vmatprep.subr.bf16.mxu0 0
      %286 = vmatpush1.bf16.msra.mxu0 %v268
      %287 = vmatprep.subr.bf16.mxu0 0
      %288 = vmatpush1.bf16.msra.mxu0 %v269
      %289 = vmatprep.subr.bf16.mxu0 0
      %290 = vmatpush1.bf16.msra.mxu0 %v270
      %291 = vmatprep.subr.bf16.mxu0 0
      %292 = vmatpush1.bf16.msra.mxu0 %v271
      %293 = vmatprep.subr.bf16.mxu0 0
      %294 = vmatpush1.bf16.msra.mxu0 %v272
      %295 = vmatprep.subr.bf16.mxu0 0
      %296 = vmatpush1.bf16.msra.mxu0 %v273
      %297 = vmatprep.subr.bf16.mxu0 0
      %298 = vmatpush1.bf16.msra.mxu0 %v274
      %299 = vmatprep.subr.bf16.mxu0 0
      %300 = vmatpush1.bf16.msra.mxu0 0
      %301 = vmatprep.subr.bf16.mxu0 0
      %302 = vmatpush1.bf16.msra.mxu0 0
      %303 = vmatprep.subr.bf16.mxu0 0
      %304 = vmatpush1.bf16.msra.mxu0 0
      %305 = vmatprep.subr.bf16.mxu0 0
      %306 = vmatpush1.bf16.msra.mxu0 0
      %307 = vmatprep.subr.bf16.mxu0 0
      %308 = vmatpush1.bf16.msra.mxu0 0
      %309 = vmatprep.subr.bf16.mxu0 0
      %310 = vmatpush1.bf16.msra.mxu0 0
      %311 = vmatprep.subr.bf16.mxu0 0
      %312 = vmatpush1.bf16.msra.mxu0 0
      %313 = vmatprep.subr.bf16.mxu0 0
      %314 = vmatpush1.bf16.msra.mxu0 0
      %315 = vmatprep.mubr.bf16.mxu0 0
      %316 = vmatmul.mubr.bf16.gmra.mrb[0].mxu0 %v218
      %v317 = vpop.f32.mrb[0].mxu0
      %v318 = vadd.f32 0.0, %v317
      %v319 = vpop.f32.mrb[0].mxu0
      %v320 = vpop.f32.mrb[0].mxu0
      %v321 = vpop.f32.mrb[0].mxu0
      %322 = vdwg.mxu0
      %v323 = vadd.f32 %v207, %v318
      %324 = vst [vmem:[#allocation12] sm:$0xff] %v323
    $region49: #{tpu_custom_call.1} parent=1 // pred_fallthru
      _
    // Predicated region
    $region50: #{tpu_custom_call.1} parent=1 // pred_check
      _
    $region51: #{tpu_custom_call.1} parent=1 // pred_check_branch
      %326 = sbr.rel (0) target = $region53
    $region52: #{tpu_custom_call.1} parent=1 // pred_region
      %s328 = ssub.s32 128, 128
      %329 = vsyncadd [#allocation5], %s328
      %s331 = sshll.u32 [#allocation12], 4
      %s332 = int_to_ptr.vmem [resolvable:$true] %s331
      %334 = dma.vmem_to_hbm [thread:$0]  %s332, 128, %s5, [#allocation5]
    $region53: #{tpu_custom_call.1} parent=1 // pred_fallthru
      _
    // Predicated region
    $region54: #{tpu_custom_call.1} parent=1 // pred_check
      _
    $region55: #{tpu_custom_call.1} parent=1 // pred_check_branch
      %336 = sbr.rel (0) target = $region57
    $region56: #{tpu_custom_call.1} parent=1 // pred_region
      %337 = dma.done [#allocation5], 128
    $region57: #{tpu_custom_call.1} parent=1 // pred_fallthru
      _
    %338 = vsyncpa [#allocation4], 1
    %339 = vsyncpa [#allocation7], 1
    %340 = vsyncpa [#allocation10], 1
    %341 = vsyncpa [#allocation5], 1

</llo_original>
